<compile_context>
chip_gen: v5e
topology: v5e:2x2
jax: 0.10.0
libtpu: 0.0.40
codegen_flags: <defaults>
</compile_context>

<pallas_src>
import functools

import numpy as np
import jax
import jax.numpy as jnp
from jax.experimental import pallas as pl
from jax.experimental.pallas import tpu as pltpu


# ----------------------------------------------------------------------------
# Kernel 1: fused projection.
#   Z  = H @ W_all                    (N, H*D)   all heads concatenated (bf16 out)
#   ST = Z @ A_all                    (N, 2H)    per-head [a_l^T z | a_r^T z]
# ----------------------------------------------------------------------------
def _proj_kernel(h_ref, w_ref, a_ref, z_ref, st_ref):
    z = jnp.dot(h_ref[...], w_ref[...], preferred_element_type=jnp.float32)
    z_ref[...] = z.astype(z_ref.dtype)                    # bf16 for the MXU path
    st_ref[...] = jnp.dot(z, a_ref[...], preferred_element_type=jnp.float32)


def gat_project(feats, w_all, a_all, *, tm):
    n, f_in = feats.shape
    hd = w_all.shape[1]
    two_h = a_all.shape[1]
    assert n % tm == 0
    return pl.pallas_call(
        _proj_kernel,
        out_shape=(
            jax.ShapeDtypeStruct((n, hd), jnp.bfloat16),
            jax.ShapeDtypeStruct((n, two_h), jnp.float32),
        ),
        grid_spec=pltpu.PrefetchScalarGridSpec(
            num_scalar_prefetch=0,
            grid=(n // tm,),
            in_specs=[
                pl.BlockSpec((tm, f_in), lambda i: (i, 0)),
                pl.BlockSpec((f_in, hd), lambda i: (0, 0)),
                pl.BlockSpec((hd, two_h), lambda i: (0, 0)),
            ],
            out_specs=(
                pl.BlockSpec((tm, hd), lambda i: (i, 0)),
                pl.BlockSpec((tm, two_h), lambda i: (i, 0)),
            ),
        ),
        compiler_params=pltpu.CompilerParams(
            dimension_semantics=("parallel",)),
    )(feats, w_all, a_all)


# ----------------------------------------------------------------------------
# Block-sparse metadata (host-side, graph structure is static like in DGL):
# per dst row-block, the indices of non-empty src col-blocks, padded with the
# last valid index (duplicate block index => Pallas skips the re-fetch).
# ----------------------------------------------------------------------------
def _block_sparse_meta(adj_mask, tm, tk):
    adj = np.asarray(adj_mask) != 0
    n = adj.shape[0]
    nrb, nkb = n // tm, n // tk
    blk_nnz = adj.reshape(nrb, tm, nkb, tk).any(axis=(1, 3))      # (nrb, nkb)
    counts = blk_nnz.sum(axis=1).astype(np.int32)                 # (nrb,)
    max_blocks = max(int(counts.max()), 1)
    cols = np.zeros((nrb, max_blocks), dtype=np.int32)
    for r in range(nrb):
        idx = np.nonzero(blk_nnz[r])[0]
        if idx.size == 0:
            idx = np.array([0])                                   # never computed
        cols[r, :idx.size] = idx
        cols[r, idx.size:] = idx[-1]                              # pad with last valid
    return jnp.asarray(cols), jnp.asarray(counts), max_blocks


# ----------------------------------------------------------------------------
# Kernel 2: fused edge attention + masked online softmax + aggregation.
#   grid = (dst row blocks, non-empty src col blocks); 2nd axis is the reduction.
# ----------------------------------------------------------------------------
def _gat_agg_kernel(cols_ref, counts_ref, adj_ref, z_ref, st_ref, t_ref, o_ref,
                    m_scr, l_scr, acc_scr, *, num_heads, head_dim, neg_slope):
    i = pl.program_id(0)
    j = pl.program_id(1)
    nj = pl.num_programs(1)

    @pl.when(j == 0)
    def _():
        m_scr[...] = jnp.full_like(m_scr, -1e30)
        l_scr[...] = jnp.zeros_like(l_scr)
        acc_scr[...] = jnp.zeros_like(acc_scr)

    @pl.when(j < counts_ref[i])                       # skip padded (all-zero) tiles
    def _():
        adj_f = (adj_ref[...] != 0).astype(jnp.float32)   # fresh f32 mask from int8
        s_all = st_ref[...]                               # (H, TK)  src terms
        t_all = t_ref[...]                                # (TM, H)  dst terms
        z_all = z_ref[...]                                # (TK, H*D) bf16, lane-dense
        m_prev_all = m_scr[...]                           # (TM, H)
        l_prev_all = l_scr[...]                           # (TM, H)
        acc_prev = acc_scr[...]                           # (TM, H*D)
        tm = adj_f.shape[0]

        m_cols, l_cols, corr_cols, upd_cols = [], [], [], []
        for h in range(num_heads):
            e = t_all[:, h:h + 1] + s_all[h:h + 1, :]            # (TM, TK) logits
            e = jnp.where(e >= 0.0, e, neg_slope * e)            # leaky_relu (0.01)
            m_prev = m_prev_all[:, h:h + 1]
            m_new = jnp.maximum(m_prev, jnp.max(e, axis=1, keepdims=True))
            p = jnp.exp(e - m_new) * adj_f                       # exact 0 off-graph
            corr = jnp.exp(m_prev - m_new)
            m_cols.append(m_new)
            l_cols.append(corr * l_prev_all[:, h:h + 1]
                          + jnp.sum(p, axis=1, keepdims=True))
            corr_cols.append(jnp.broadcast_to(corr, (tm, head_dim)))
            zh = z_all[:, h * head_dim:(h + 1) * head_dim]       # (TK, D) bf16
            upd_cols.append(jnp.dot(p.astype(jnp.bfloat16), zh,
                                    preferred_element_type=jnp.float32))

        # Single full-width scratch writes (lane-dense for acc).
        m_scr[...] = jnp.concatenate(m_cols, axis=1)
        l_scr[...] = jnp.concatenate(l_cols, axis=1)
        acc_scr[...] = (jnp.concatenate(corr_cols, axis=1) * acc_prev
                        + jnp.concatenate(upd_cols, axis=1))

    @pl.when(j == nj - 1)
    def _():
        tm = o_ref.shape[0]
        l_all = jnp.maximum(l_scr[...], 1e-30)               # guard 0-in-degree
        inv_cols = [
            jnp.broadcast_to(pl.reciprocal(l_all[:, h:h + 1], approx=True),
                             (tm, head_dim))
            for h in range(num_heads)
        ]
        o_ref[...] = (acc_scr[...] * jnp.concatenate(inv_cols, axis=1)
                      ).astype(o_ref.dtype)


def gat_aggregate(adj_i8, z_bf16, s_t, t, cols, counts, *, num_heads, head_dim,
                  tm, tk, max_blocks, neg_slope=0.01, vmem_limit_bytes=None):
    n = adj_i8.shape[0]
    hd = num_heads * head_dim
    assert n % tm == 0 and n % tk == 0
    nrb = n // tm

    kernel = functools.partial(_gat_agg_kernel, num_heads=num_heads,
                               head_dim=head_dim, neg_slope=neg_slope)

    # Advisory cost estimate (upper bound using padded tile count).
    tiles = nrb * max_blocks
    flops = tiles * (2 * tm * tk * hd + 8 * tm * tk * num_heads)
    transcendentals = tiles * tm * tk * num_heads
    bytes_accessed = (tiles * (tm * tk + 2 * tk * hd)      # int8 adj + bf16 Z
                      + 4 * n * hd + 8 * n * num_heads)

    return pl.pallas_call(
        kernel,
        out_shape=jax.ShapeDtypeStruct((n, hd), jnp.float32),
        grid_spec=pltpu.PrefetchScalarGridSpec(
            num_scalar_prefetch=2,                        # cols, counts -> SMEM
            grid=(nrb, max_blocks),
            in_specs=[
                # A[v,u] structural mask, int8, data-dependent column block
                pl.BlockSpec((tm, tk), lambda i, j, cols, counts: (i, cols[i, j])),
                # Z (source features, bf16)
                pl.BlockSpec((tk, hd), lambda i, j, cols, counts: (cols[i, j], 0)),
                # S^T (source attention term), (H, N)
                pl.BlockSpec((num_heads, tk),
                             lambda i, j, cols, counts: (0, cols[i, j])),
                # T (dest attention term), (N, H)
                pl.BlockSpec((tm, num_heads), lambda i, j, cols, counts: (i, 0)),
            ],
            out_specs=pl.BlockSpec((tm, hd), lambda i, j, cols, counts: (i, 0)),
            scratch_shapes=[
                pltpu.VMEM((tm, num_heads), jnp.float32),   # running max
                pltpu.VMEM((tm, num_heads), jnp.float32),   # running sum
                pltpu.VMEM((tm, hd), jnp.float32),          # accumulator
            ],
        ),
        compiler_params=pltpu.CompilerParams(
            dimension_semantics=("parallel", "arbitrary"),
            vmem_limit_bytes=vmem_limit_bytes),
        cost_estimate=pl.CostEstimate(
            flops=int(flops),
            transcendentals=int(transcendentals),
            bytes_accessed=int(bytes_accessed)),
    )(cols, counts, adj_i8, z_bf16, s_t, t)


# ----------------------------------------------------------------------------
# MultiHeadGATLayer forward (glue in plain JAX, hot path in Pallas)
# ----------------------------------------------------------------------------
def multi_head_gat_forward(adj_mask, feats, fc_weights, attn_weights,
                           *, merge="cat", tm=128, tk=128,
                           vmem_limit_bytes=None):
    """
    adj_mask:     (N, N), adj_mask[v, u] != 0 iff edge u -> v (static graph)
    feats:        (N, F_in)
    fc_weights:   per head, (out_dim, in_dim)  (torch nn.Linear weight layout)
    attn_weights: per head, (1, 2*out_dim)
    """
    num_heads = len(fc_weights)
    out_dim = fc_weights[0].shape[0]
    hd = num_heads * out_dim
    n = feats.shape[0]
    assert n % tm == 0 and n % tk == 0

    # Pack parameters once: W_all = [W_0^T | W_1^T | ...] -> (F_in, H*D);
    # A_all block-structured so ST = Z @ A_all gives [a_l^T z | a_r^T z] per head.
    w_all = jnp.concatenate([w.T for w in fc_weights], axis=1).astype(jnp.float32)
    a_all = jnp.zeros((hd, 2 * num_heads), jnp.float32)
    for h, a in enumerate(attn_weights):
        a = jnp.reshape(a, (-1,)).astype(jnp.float32)
        a_all = a_all.at[h * out_dim:(h + 1) * out_dim, h].set(a[:out_dim])
        a_all = a_all.at[h * out_dim:(h + 1) * out_dim,
                         num_heads + h].set(a[out_dim:])

    z, st_all = gat_project(feats.astype(jnp.float32), w_all, a_all, tm=tm)
    s = st_all[:, :num_heads]            # (N, H)  source term  a_l^T z
    t = st_all[:, num_heads:]            # (N, H)  dest term    a_r^T z

    adj_i8 = (adj_mask != 0).astype(jnp.int8)
    cols, counts, max_blocks = _block_sparse_meta(adj_mask, tm, tk)

    out = gat_aggregate(adj_i8, z, jnp.transpose(s), t, cols, counts,
                        num_heads=num_heads, head_dim=out_dim, tm=tm, tk=tk,
                        max_blocks=max_blocks,
                        vmem_limit_bytes=vmem_limit_bytes)
    if merge == "cat":
        return out                       # heads already concatenated along dim=1
    # Reference 'else' branch is torch.mean(torch.stack(head_outs)) -> scalar.
    return jnp.mean(out)


# ----------------------------------------------------------------------------
# Pure-JAX reference for validation
# ----------------------------------------------------------------------------
def gat_reference(adj_mask, feats, fc_weights, attn_weights, neg_slope=0.01):
    outs = []
    for w, a in zip(fc_weights, attn_weights):
        z = feats @ w.T
        a = a.reshape(-1)
        d = z.shape[1]
        s = z @ a[:d]
        t = z @ a[d:]
        e = t[:, None] + s[None, :]
        e = jnp.where(e >= 0, e, neg_slope * e)
        e = jnp.where(adj_mask > 0, e, -jnp.inf)
        alpha = jax.nn.softmax(e, axis=1)
        outs.append(alpha @ z)
    return jnp.concatenate(outs, axis=1)


if __name__ == "__main__":
    key = jax.random.PRNGKey(0)

    # Small graph: 256 nodes, 4 heads x 32 dims -> lane-dense 128-wide output.
    N, in_dim, out_dim, num_heads = 256, 64, 32, 4

    keys = jax.random.split(key, 2 + 2 * num_heads)
    k_adj, k_feat = keys[0], keys[1]
    adj = (jax.random.uniform(k_adj, (N, N)) < 0.05).astype(jnp.float32)
    adj = jnp.maximum(adj, jnp.eye(N, dtype=jnp.float32))  # self loops
    feats = jax.random.normal(k_feat, (N, in_dim), jnp.float32)

    gain = jnp.sqrt(2.0)  # nn.init.calculate_gain('relu')
    fc_weights, attn_weights = [], []
    for h in range(num_heads):
        std_fc = gain * jnp.sqrt(2.0 / (in_dim + out_dim))
        fc_weights.append(
            std_fc * jax.random.normal(keys[2 + 2 * h], (out_dim, in_dim),
                                       jnp.float32))
        std_a = gain * jnp.sqrt(2.0 / (2 * out_dim + 1))
        attn_weights.append(
            std_a * jax.random.normal(keys[3 + 2 * h], (1, 2 * out_dim),
                                      jnp.float32))

    out = multi_head_gat_forward(adj, feats, fc_weights, attn_weights,
                                 tm=128, tk=128)
    out = jax.block_until_ready(out)
    assert out.shape == (N, num_heads * out_dim)

    ref = gat_reference(adj, feats, fc_weights, attn_weights)
    # bf16 MXU path vs f32 reference -> looser tolerance than the pure-f32 kernel.
    assert jnp.allclose(out, ref, atol=3e-2, rtol=3e-2), \
        float(jnp.max(jnp.abs(out - ref)))
    print("KERNEL_OK")
</pallas_src>

<mosaic_0001>
module attributes {stable_mosaic.version = 11 : i64} {
  func.func @_proj_kernel(%arg0: i32, %arg1: memref<128x64xf32, #tpu.memory_space<vmem>>, %arg2: memref<64x128xf32, #tpu.memory_space<vmem>>, %arg3: memref<128x8xf32, #tpu.memory_space<vmem>>, %arg4: memref<128x128xbf16, #tpu.memory_space<vmem>>, %arg5: memref<128x8xf32, #tpu.memory_space<vmem>>) attributes {dimension_semantics = [#tpu.dimension_semantics<parallel>], iteration_bounds = array<i64: 2>, scalar_prefetch = 0 : i64, scratch_operands = 0 : i64, tpu.core_type = #tpu.core_type<tc>, window_params = [{transform_indices = @transform_0, window_bounds = array<i64: 128, 64>}, {pipeline_mode = #tpu.pipeline_mode<synchronous>, transform_indices = @transform_1, window_bounds = array<i64: 64, 128>}, {pipeline_mode = #tpu.pipeline_mode<synchronous>, transform_indices = @transform_2, window_bounds = array<i64: 128, 8>}, {transform_indices = @transform_3, window_bounds = array<i64: 128, 128>}, {transform_indices = @transform_4, window_bounds = array<i64: 128, 8>}]} {
    %c0 = arith.constant 0 : index
    %c0_0 = arith.constant 0 : index
    %0 = vector.load %arg1[%c0, %c0_0] : memref<128x64xf32, #tpu.memory_space<vmem>>, vector<128x64xf32>
    %c0_1 = arith.constant 0 : index
    %c0_2 = arith.constant 0 : index
    %1 = vector.load %arg2[%c0_1, %c0_2] : memref<64x128xf32, #tpu.memory_space<vmem>>, vector<64x128xf32>
    %cst = arith.constant dense<0.000000e+00> : vector<128x128xf32>
    %2 = tpu.matmul %0, %1, %cst {dimension_numbers = #tpu.dot_dimension_numbers<[1], [0], [0], [1], [0, 0, 1, 1], [], []>} : vector<128x64xf32>, vector<64x128xf32>, vector<128x128xf32> -> vector<128x128xf32>
    %3 = arith.truncf %2 : vector<128x128xf32> to vector<128x128xbf16>
    %c0_3 = arith.constant 0 : index
    %c0_4 = arith.constant 0 : index
    %4 = vector.load %arg4[%c0_3, %c0_4] : memref<128x128xbf16, #tpu.memory_space<vmem>>, vector<128x128xbf16>
    tpu.vector_store %arg4[%c0_3, %c0_4], %3 {strides = array<i32>} : memref<128x128xbf16, #tpu.memory_space<vmem>>, vector<128x128xbf16>,
    %c0_5 = arith.constant 0 : index
    %c0_6 = arith.constant 0 : index
    %5 = vector.load %arg3[%c0_5, %c0_6] : memref<128x8xf32, #tpu.memory_space<vmem>>, vector<128x8xf32>
    %cst_7 = arith.constant dense<0.000000e+00> : vector<128x8xf32>
    %6 = tpu.matmul %2, %5, %cst_7 {dimension_numbers = #tpu.dot_dimension_numbers<[1], [0], [0], [1], [0, 0, 1, 1], [], []>} : vector<128x128xf32>, vector<128x8xf32>, vector<128x8xf32> -> vector<128x8xf32>
    %c0_8 = arith.constant 0 : index
    %c0_9 = arith.constant 0 : index
    %7 = vector.load %arg5[%c0_8, %c0_9] : memref<128x8xf32, #tpu.memory_space<vmem>>, vector<128x8xf32>
    tpu.vector_store %arg5[%c0_8, %c0_9], %6 {strides = array<i32>} : memref<128x8xf32, #tpu.memory_space<vmem>>, vector<128x8xf32>,
    return
  }
  func.func @transform_0(%arg0: i32) -> (i32, i32) {
    %c0_i32 = arith.constant 0 : i32
    %c0_i32_0 = arith.constant 0 : i32
    return %arg0, %c0_i32 : i32, i32
  }
  func.func @transform_1(%arg0: i32) -> (i32, i32) {
    %c0_i32 = arith.constant 0 : i32
    %c0_i32_0 = arith.constant 0 : i32
    %c0_i32_1 = arith.constant 0 : i32
    return %c0_i32, %c0_i32_0 : i32, i32
  }
  func.func @transform_2(%arg0: i32) -> (i32, i32) {
    %c0_i32 = arith.constant 0 : i32
    %c0_i32_0 = arith.constant 0 : i32
    %c0_i32_1 = arith.constant 0 : i32
    return %c0_i32, %c0_i32_0 : i32, i32
  }
  func.func @transform_3(%arg0: i32) -> (i32, i32) {
    %c0_i32 = arith.constant 0 : i32
    %c0_i32_0 = arith.constant 0 : i32
    return %arg0, %c0_i32 : i32, i32
  }
  func.func @transform_4(%arg0: i32) -> (i32, i32) {
    %c0_i32 = arith.constant 0 : i32
    %c0_i32_0 = arith.constant 0 : i32
    return %arg0, %c0_i32 : i32, i32
  }
}

</mosaic_0001>

<llo_original>
// kernel: tpu_custom_call.1
$region0: #{tpu_custom_call.1}
  #allocation0 [shape = 'u32[]', space=smem, size = 0x4, offset = 0x4, fixed_abs, tag = 'smem constant byte address 0x4 - core index']
  #allocation1 [shape = 'u32[72,128]{1,0:T(1,128)}', space=vmem, size = 0x9000, scoped, tag = 'internal scratch']
  %s0 = inlined_call_operand.vmem [shape: f32[256,64], index: 0, kind: input, shape index: {}]
  %s1 = inlined_call_operand.vmem [shape: f32[64,128], index: 1, kind: input, shape index: {}]
  %s2 = inlined_call_operand.vmem [shape: f32[128,8], index: 2, kind: input, shape index: {}]
  %s3 = inlined_call_operand.hbm [shape: bf16[256,128], index: 3, kind: output, shape index: {0}]
  %s4 = inlined_call_operand.vmem [shape: f32[256,8], index: 4, kind: output, shape index: {1}]
  %5 = xla_tuple %s3, %s4
  %s6 = sld [smem:[#allocation0]]
  $region53: #{tpu_custom_call.1} parent=0
    _
  %s8 = ssub.s32 1, %s6
  %s9 = scalar_select 0, %s8, %s6
  $region1: #{tpu_custom_call.1} parent=0
    #allocation2 [shape = 'u8[65536]{0}', space=vmem, size = 0x10000, scoped, tag = 'output window, operand 0']
    #allocation3 [shape = 's32[2]{0}', space=sflag, size = 0x8, scoped, tag = 'scoped memory for tpu_custom_call.1']
    %10 = vsyncpa [#allocation3], 0
    %s11 = scalar_lea.sflag [#allocation3], 1
    %12 = vsyncpa %s11, 0
    loop: start=0, step=1, limit=4
    $region2: #{tpu_custom_call.1} parent=1 // loop_pre_header
      _
    $region3: #{tpu_custom_call.1} parent=1 // loop_header
      %s14 = sphi 0, %s18
      %p15 = scmp.ge.s32.totalorder %s14, 4
      %s24 = sphi 0, %s26
      %s27 = sphi 0, %s24
      %s28 = sphi 0, %s27
      %s44 = sphi 0, %s28
      %s48 = sphi 0, %s48
      %s50 = sphi 0, %s48
      %s51 = sphi 0, %s50
      %s65 = sphi 0, %s51
      %s69 = sphi 0, %s69
      %s71 = sphi 0, %s69
      %s72 = sphi 0, %s71
      %s86 = sphi 0, %s72
      %s92 = sphi 0, %s94
      %s95 = sphi 0, %s92
      %s96 = sphi 0, %s95
      %s112 = sphi 0, %s96
      %s118 = sphi 0, %s120
      %s121 = sphi 0, %s118
      %s122 = sphi 0, %s121
      %s138 = sphi 0, %s122
    $region4: #{tpu_custom_call.1} parent=1 // loop_header_branch
      %17 = sbr.rel (%p15) target = $region8
    $region5: #{tpu_custom_call.1} parent=1 // loop_body
      %s19 = ssub.s32 %s14, 1
      %s20 = ssub.s32 %s14, 2
      %s21 = sadd.s32 %s14, 1
      %s22 = ssub.s32 %s14, %s21
      %p23 = scmp.eq.s32.totalorder %s22, 0
      %s25 = sadd.s32 %s24, 1
      %s26 = scalar_select %p23, %s24, %s25
      %p29 = pneg %p23
      %p30 = scmp.eq.s32.totalorder %s14, 1
      %p31 = por %p29, %p30
      %p32 = scmp.ne.s32.totalorder %s24, %s27
      %p33 = scmp.eq.s32.totalorder %s14, 0
      %p34 = por %p32, %p33
      %p35 = scmp.ne.s32.totalorder %s24, %s27
      %p36 = scmp.eq.s32.totalorder %s19, 1
      %p37 = por %p35, %p36
      %p38 = scmp.ne.s32.totalorder %s27, %s28
      %p39 = scmp.eq.s32.totalorder %s19, 0
      %p40 = por %p38, %p39
      %p41 = scmp.ne.s32.totalorder %s27, %s28
      %p42 = scmp.eq.s32.totalorder %s20, 1
      %p43 = por %p41, %p42
      %p45 = scmp.ne.s32.totalorder %s28, %s44
      %p46 = scmp.eq.s32.totalorder %s20, 0
      %p47 = por %p45, %p46
      %s49 = sadd.s32 %s48, 1
      %p52 = scmp.eq.s32.totalorder %s14, 1
      %p53 = scmp.ne.s32.totalorder %s48, %s50
      %p54 = scmp.eq.s32.totalorder %s14, 0
      %p55 = por %p53, %p54
      %p56 = scmp.ne.s32.totalorder %s48, %s50
      %p57 = scmp.eq.s32.totalorder %s19, 1
      %p58 = por %p56, %p57
      %p59 = scmp.ne.s32.totalorder %s50, %s51
      %p60 = scmp.eq.s32.totalorder %s19, 0
      %p61 = por %p59, %p60
      %p62 = scmp.ne.s32.totalorder %s50, %s51
      %p63 = scmp.eq.s32.totalorder %s20, 1
      %p64 = por %p62, %p63
      %p66 = scmp.ne.s32.totalorder %s51, %s65
      %p67 = scmp.eq.s32.totalorder %s20, 0
      %p68 = por %p66, %p67
      %s70 = sadd.s32 %s69, 1
      %p73 = scmp.eq.s32.totalorder %s14, 1
      %p74 = scmp.ne.s32.totalorder %s69, %s71
      %p75 = scmp.eq.s32.totalorder %s14, 0
      %p76 = por %p74, %p75
      %p77 = scmp.ne.s32.totalorder %s69, %s71
      %p78 = scmp.eq.s32.totalorder %s19, 1
      %p79 = por %p77, %p78
      %p80 = scmp.ne.s32.totalorder %s71, %s72
      %p81 = scmp.eq.s32.totalorder %s19, 0
      %p82 = por %p80, %p81
      %p83 = scmp.ne.s32.totalorder %s71, %s72
      %p84 = scmp.eq.s32.totalorder %s20, 1
      %p85 = por %p83, %p84
      %p87 = scmp.ne.s32.totalorder %s72, %s86
      %p88 = scmp.eq.s32.totalorder %s20, 0
      %p89 = por %p87, %p88
      %s90 = ssub.s32 %s14, %s21
      %p91 = scmp.eq.s32.totalorder %s90, 0
      %s93 = sadd.s32 %s92, 1
      %s94 = scalar_select %p91, %s92, %s93
      %p97 = pneg %p91
      %p98 = scmp.eq.s32.totalorder %s14, 1
      %p99 = por %p97, %p98
      %p100 = scmp.ne.s32.totalorder %s92, %s95
      %p101 = scmp.eq.s32.totalorder %s14, 0
      %p102 = por %p100, %p101
      %p103 = scmp.ne.s32.totalorder %s92, %s95
      %p104 = scmp.eq.s32.totalorder %s19, 1
      %p105 = por %p103, %p104
      %p106 = scmp.ne.s32.totalorder %s95, %s96
      %p107 = scmp.eq.s32.totalorder %s19, 0
      %p108 = por %p106, %p107
      %p109 = scmp.ne.s32.totalorder %s95, %s96
      %p110 = scmp.eq.s32.totalorder %s20, 1
      %p111 = por %p109, %p110
      %p113 = scmp.ne.s32.totalorder %s96, %s112
      %p114 = scmp.eq.s32.totalorder %s20, 0
      %p115 = por %p113, %p114
      %s116 = ssub.s32 %s14, %s21
      %p117 = scmp.eq.s32.totalorder %s116, 0
      %s119 = sadd.s32 %s118, 1
      %s120 = scalar_select %p117, %s118, %s119
      %p123 = pneg %p117
      %p124 = scmp.eq.s32.totalorder %s14, 1
      %p125 = por %p123, %p124
      %p126 = scmp.ne.s32.totalorder %s118, %s121
      %p127 = scmp.eq.s32.totalorder %s14, 0
      %p128 = por %p126, %p127
      %p129 = scmp.ne.s32.totalorder %s118, %s121
      %p130 = scmp.eq.s32.totalorder %s19, 1
      %p131 = por %p129, %p130
      %p132 = scmp.ne.s32.totalorder %s121, %s122
      %p133 = scmp.eq.s32.totalorder %s19, 0
      %p134 = por %p132, %p133
      %p135 = scmp.ne.s32.totalorder %s121, %s122
      %p136 = scmp.eq.s32.totalorder %s20, 1
      %p137 = por %p135, %p136
      %p139 = scmp.ne.s32.totalorder %s122, %s138
      %p140 = scmp.eq.s32.totalorder %s20, 0
      %p141 = por %p139, %p140
      %p142 = scmp.le.s32.totalorder 1, %s14
      %p143 = scmp.lt.s32.totalorder %s14, 3
      %p144 = pnand %p142, %p143
      %p145 = pneg %p144
      // Predicated region
      $region9: #{tpu_custom_call.1} parent=5 // pred_check
        _
      $region10: #{tpu_custom_call.1} parent=5 // pred_check_branch
        %147 = sbr.rel (%p144) target = $region12
      $region11: #{tpu_custom_call.1} parent=5 // pred_region
        %s148 = ssub.s32 %s14, 1
        // Predicated region
        $region13: #{tpu_custom_call.1} parent=11 // pred_check
          %p149 = pneg %p61
        $region14: #{tpu_custom_call.1} parent=11 // pred_check_branch
          %151 = sbr.rel (%p149) target = $region16
        $region15: #{tpu_custom_call.1} parent=11 // pred_region
          _
        $region16: #{tpu_custom_call.1} parent=11 // pred_fallthru
          _
        // Predicated region
        $region17: #{tpu_custom_call.1} parent=11 // pred_check
          %p152 = pneg %p82
        $region18: #{tpu_custom_call.1} parent=11 // pred_check_branch
          %154 = sbr.rel (%p152) target = $region20
        $region19: #{tpu_custom_call.1} parent=11 // pred_region
          _
        $region20: #{tpu_custom_call.1} parent=11 // pred_fallthru
          _
      $region12: #{tpu_custom_call.1} parent=5 // pred_fallthru
        _
      %p155 = scmp.lt.s32.totalorder %s14, 2
      // Predicated region
      $region21: #{tpu_custom_call.1} parent=5 // pred_check
        %p156 = pneg %p155
      $region22: #{tpu_custom_call.1} parent=5 // pred_check_branch
        %158 = sbr.rel (%p156) target = $region24
      $region23: #{tpu_custom_call.1} parent=5 // pred_region
        // Predicated region
        $region25: #{tpu_custom_call.1} parent=23 // pred_check
          %p159 = pneg %p34
        $region26: #{tpu_custom_call.1} parent=23 // pred_check_branch
          %161 = sbr.rel (%p159) target = $region28
        $region27: #{tpu_custom_call.1} parent=23 // pred_region
          %s162 = smul.u32 16, %s14
          %p163 = scmp.lt.s32.totalorder %s162, 31
          %s164 = scalar_select %p163, %s162, 31
          %s165 = smul.addr %s164, 8
          %s166 = scalar_lea.vmem %s0, %s165
          %s167 = smul.u32 16, %s14
        $region28: #{tpu_custom_call.1} parent=23 // pred_fallthru
          _
      $region24: #{tpu_custom_call.1} parent=5 // pred_fallthru
        _
      %p168 = scmp.le.s32.totalorder 1, %s14
      %p169 = scmp.lt.s32.totalorder %s14, 3
      %p170 = pnand %p168, %p169
      %p171 = pneg %p170
      // Predicated region
      $region29: #{tpu_custom_call.1} parent=5 // pred_check
        _
      $region30: #{tpu_custom_call.1} parent=5 // pred_check_branch
        %173 = sbr.rel (%p170) target = $region32
      $region31: #{tpu_custom_call.1} parent=5 // pred_region
        %s174 = ssub.s32 %s14, 1
        %s175 = smul.u32 16, %s19
        %p176 = scmp.lt.s32.totalorder %s175, 31
        %s177 = scalar_select %p176, %s175, 31
        %s178 = smul.addr %s177, 8
        %s179 = scalar_lea.vmem %s0, %s178
        %p180 = pneg %p40
        %p181 = pneg %p37
        %p182 = pneg %p61
        %p183 = pneg %p58
        %p184 = pneg %p82
        %p185 = pneg %p79
        %p186 = pneg %p108
        %p187 = pneg %p105
        %s188 = sand.u32 %s95, 1
        %s189 = scalar_lea.sflag [#allocation3], %s188
        %s190 = sand.u32 %s95, 1
        %s191 = smul.addr %s190, 64
        %s192 = scalar_lea.vmem [#allocation2], %s191
        %p193 = pneg %p134
        %p194 = pneg %p131
        %s195 = smul.u32 16, %s19
        %p196 = scmp.lt.s32.totalorder %s195, 31
        %s197 = scalar_select %p196, %s195, 31
        %s198 = smul.addr %s197, 8
        %s199 = scalar_lea.vmem %s4, %s198
        %s200 = smul.u32 16, %s19
        %p201 = scmp.lt.s32.totalorder %s200, 31
        %s202 = scalar_select %p201, %s200, 31
        %s203 = smul.addr %s202, 8
        %s204 = scalar_lea.vmem %s0, %s203
        %s205 = smul.u32 16, %s19
        %s206 = smul.u32 16, %s19
        %s207 = smul.u32 16, %s19
        %p208 = scmp.lt.s32.totalorder %s207, 31
        %s209 = scalar_select %p208, %s207, 31
        %s210 = smul.addr %s209, 8
        %s211 = scalar_lea.vmem %s4, %s210
        %s212 = smul.u32 16, %s19
        %v213 = vld [vmem:[%s204] sm:$0xff]
        %v214 = vld [vmem:[%s204 + $0x8] sm:$0xff]
        %v215 = vld [vmem:[%s204 + $0x10] sm:$0xff]
        %v216 = vld [vmem:[%s204 + $0x18] sm:$0xff]
        %v217 = vld [vmem:[%s204 + $0x20] sm:$0xff]
        %v218 = vld [vmem:[%s204 + $0x28] sm:$0xff]
        %v219 = vld [vmem:[%s204 + $0x30] sm:$0xff]
        %v220 = vld [vmem:[%s204 + $0x38] sm:$0xff]
        %v221 = vld [vmem:[%s204 + $0x40] sm:$0xff]
        %v222 = vld [vmem:[%s204 + $0x48] sm:$0xff]
        %v223 = vld [vmem:[%s204 + $0x50] sm:$0xff]
        %v224 = vld [vmem:[%s204 + $0x58] sm:$0xff]
        %v225 = vld [vmem:[%s204 + $0x60] sm:$0xff]
        %v226 = vld [vmem:[%s204 + $0x68] sm:$0xff]
        %v227 = vld [vmem:[%s204 + $0x70] sm:$0xff]
        %v228 = vld [vmem:[%s204 + $0x78] sm:$0xff]
        %v229 = vld [vmem:[%s1] sm:$0xff]
        %v230 = vld [vmem:[%s1 + $0x8] sm:$0xff]
        %v231 = vld [vmem:[%s1 + $0x10] sm:$0xff]
        %v232 = vld [vmem:[%s1 + $0x18] sm:$0xff]
        %v233 = vld [vmem:[%s1 + $0x20] sm:$0xff]
        %v234 = vld [vmem:[%s1 + $0x28] sm:$0xff]
        %v235 = vld [vmem:[%s1 + $0x30] sm:$0xff]
        %v236 = vld [vmem:[%s1 + $0x38] sm:$0xff]
        %vm237 = vcmask 523264
        %v239 = vsel %vm237, %v213, 0
        %v242 = vsel %vm237, %v214, 0
        %v245 = vsel %vm237, %v215, 0
        %v248 = vsel %vm237, %v216, 0
        %v251 = vsel %vm237, %v217, 0
        %v254 = vsel %vm237, %v218, 0
        %v257 = vsel %vm237, %v219, 0
        %v260 = vsel %vm237, %v220, 0
        %v263 = vsel %vm237, %v221, 0
        %v266 = vsel %vm237, %v222, 0
        %v269 = vsel %vm237, %v223, 0
        %v272 = vsel %vm237, %v224, 0
        %v275 = vsel %vm237, %v225, 0
        %v278 = vsel %vm237, %v226, 0
        %v281 = vsel %vm237, %v227, 0
        %v284 = vsel %vm237, %v228, 0
        %286 = vmatpush.msra.mxu0 0.0
        %287 = vmatpush.msra.mxu0 0.0
        %288 = vmatpush.msra.mxu0 0.0
        %289 = vmatpush.msra.mxu0 0.0
        %290 = vmatpush.msra.mxu0 0.0
        %291 = vmatpush.msra.mxu0 0.0
        %292 = vmatpush.msra.mxu0 0.0
        %293 = vmatpush.msra.mxu0 0.0
        %294 = vmatpush.msra.mxu0 %v236
        %295 = vmatpush.msra.mxu0 %v235
        %296 = vmatpush.msra.mxu0 %v234
        %297 = vmatpush.msra.mxu0 %v233
        %298 = vmatpush.msra.mxu0 %v232
        %299 = vmatpush.msra.mxu0 %v231
        %300 = vmatpush.msra.mxu0 %v230
        %301 = vmatpush.msra.mxu0 %v229
        %302 = vmatmul.f32.gmra.mxu0 %v239
        %v303 = vpop.f32.mrf.mxu0
        %v304 = vadd.f32 0.0, %v303
        %305 = vmatmul.f32.gmra.mxu0 %v242
        %v306 = vpop.f32.mrf.mxu0
        %v307 = vadd.f32 0.0, %v306
        %308 = vmatmul.f32.gmra.mxu0 %v245
        %v309 = vpop.f32.mrf.mxu0
        %v310 = vadd.f32 0.0, %v309
        %311 = vmatmul.f32.gmra.mxu0 %v248
        %v312 = vpop.f32.mrf.mxu0
        %v313 = vadd.f32 0.0, %v312
        %314 = vmatmul.f32.gmra.mxu0 %v251
        %v315 = vpop.f32.mrf.mxu0
        %v316 = vadd.f32 0.0, %v315
        %317 = vmatmul.f32.gmra.mxu0 %v254
        %v318 = vpop.f32.mrf.mxu0
        %v319 = vadd.f32 0.0, %v318
        %320 = vmatmul.f32.gmra.mxu0 %v257
        %v321 = vpop.f32.mrf.mxu0
        %v322 = vadd.f32 0.0, %v321
        %323 = vmatmul.f32.gmra.mxu0 %v260
        %v324 = vpop.f32.mrf.mxu0
        %v325 = vadd.f32 0.0, %v324
        %326 = vmatmul.f32.gmra.mxu0 %v263
        %v327 = vpop.f32.mrf.mxu0
        %v328 = vadd.f32 0.0, %v327
        %329 = vmatmul.f32.gmra.mxu0 %v266
        %v330 = vpop.f32.mrf.mxu0
        %v331 = vadd.f32 0.0, %v330
        %332 = vmatmul.f32.gmra.mxu0 %v269
        %v333 = vpop.f32.mrf.mxu0
        %v334 = vadd.f32 0.0, %v333
        %335 = vmatmul.f32.gmra.mxu0 %v272
        %v336 = vpop.f32.mrf.mxu0
        %v337 = vadd.f32 0.0, %v336
        %338 = vmatmul.f32.gmra.mxu0 %v275
        %v339 = vpop.f32.mrf.mxu0
        %v340 = vadd.f32 0.0, %v339
        %341 = vmatmul.f32.gmra.mxu0 %v278
        %v342 = vpop.f32.mrf.mxu0
        %v343 = vadd.f32 0.0, %v342
        %344 = vmatmul.f32.gmra.mxu0 %v281
        %v345 = vpop.f32.mrf.mxu0
        %v346 = vadd.f32 0.0, %v345
        %347 = vmatmul.f32.gmra.mxu0 %v284
        %v348 = vpop.f32.mrf.mxu0
        %v349 = vadd.f32 0.0, %v348
        %350 = vdwg.mxu0
        %v351 = vpack.c.bf16 %v304, %v304
        %v352 = vpack.c.bf16 %v307, %v307
        %v353 = vpack.c.bf16 %v310, %v310
        %v354 = vpack.c.bf16 %v313, %v313
        %v355 = vpack.c.bf16 %v316, %v316
        %v356 = vpack.c.bf16 %v319, %v319
        %v357 = vpack.c.bf16 %v322, %v322
        %v358 = vpack.c.bf16 %v325, %v325
        %v359 = vpack.c.bf16 %v328, %v328
        %v360 = vpack.c.bf16 %v331, %v331
        %v361 = vpack.c.bf16 %v334, %v334
        %v362 = vpack.c.bf16 %v337, %v337
        %v363 = vpack.c.bf16 %v340, %v340
        %v364 = vpack.c.bf16 %v343, %v343
        %v365 = vpack.c.bf16 %v346, %v346
        %v366 = vpack.c.bf16 %v349, %v349
        %367 = vst [vmem:[%s192] sm:$0xf] %v351
        %368 = vst [vmem:[%s192 + $0x4] sm:$0xf] %v352
        %369 = vst [vmem:[%s192 + $0x8] sm:$0xf] %v353
        %370 = vst [vmem:[%s192 + $0xc] sm:$0xf] %v354
        %371 = vst [vmem:[%s192 + $0x10] sm:$0xf] %v355
        %372 = vst [vmem:[%s192 + $0x14] sm:$0xf] %v356
        %373 = vst [vmem:[%s192 + $0x18] sm:$0xf] %v357
        %374 = vst [vmem:[%s192 + $0x1c] sm:$0xf] %v358
        %375 = vst [vmem:[%s192 + $0x20] sm:$0xf] %v359
        %376 = vst [vmem:[%s192 + $0x24] sm:$0xf] %v360
        %377 = vst [vmem:[%s192 + $0x28] sm:$0xf] %v361
        %378 = vst [vmem:[%s192 + $0x2c] sm:$0xf] %v362
        %379 = vst [vmem:[%s192 + $0x30] sm:$0xf] %v363
        %380 = vst [vmem:[%s192 + $0x34] sm:$0xf] %v364
        %381 = vst [vmem:[%s192 + $0x38] sm:$0xf] %v365
        %382 = vst [vmem:[%s192 + $0x3c] sm:$0xf] %v366
        %v383 = vld [vmem:[%s2] sm:$0xff]
        %v384 = vld [vmem:[%s2 + $0x8] sm:$0xff]
        %v385 = vld [vmem:[%s2 + $0x10] sm:$0xff]
        %v386 = vld [vmem:[%s2 + $0x18] sm:$0xff]
        %v387 = vld [vmem:[%s2 + $0x20] sm:$0xff]
        %v388 = vld [vmem:[%s2 + $0x28] sm:$0xff]
        %v389 = vld [vmem:[%s2 + $0x30] sm:$0xff]
        %v390 = vld [vmem:[%s2 + $0x38] sm:$0xff]
        %v391 = vld [vmem:[%s2 + $0x40] sm:$0xff]
        %v392 = vld [vmem:[%s2 + $0x48] sm:$0xff]
        %v393 = vld [vmem:[%s2 + $0x50] sm:$0xff]
        %v394 = vld [vmem:[%s2 + $0x58] sm:$0xff]
        %v395 = vld [vmem:[%s2 + $0x60] sm:$0xff]
        %v396 = vld [vmem:[%s2 + $0x68] sm:$0xff]
        %v397 = vld [vmem:[%s2 + $0x70] sm:$0xff]
        %v398 = vld [vmem:[%s2 + $0x78] sm:$0xff]
        %399 = vmatpush.msra.mxu0 %v398
        %400 = vmatpush.msra.mxu0 %v397
        %401 = vmatpush.msra.mxu0 %v396
        %402 = vmatpush.msra.mxu0 %v395
        %403 = vmatpush.msra.mxu0 %v394
        %404 = vmatpush.msra.mxu0 %v393
        %405 = vmatpush.msra.mxu0 %v392
        %406 = vmatpush.msra.mxu0 %v391
        %407 = vmatpush.msra.mxu0 %v390
        %408 = vmatpush.msra.mxu0 %v389
        %409 = vmatpush.msra.mxu0 %v388
        %410 = vmatpush.msra.mxu0 %v387
        %411 = vmatpush.msra.mxu0 %v386
        %412 = vmatpush.msra.mxu0 %v385
        %413 = vmatpush.msra.mxu0 %v384
        %414 = vmatpush.msra.mxu0 %v383
        %415 = vmatmul.f32.gmra.mxu0 %v304
        %v416 = vpop.f32.mrf.mxu0
        %v417 = vadd.f32 0.0, %v416
        %418 = vmatmul.f32.gmra.mxu0 %v307
        %v419 = vpop.f32.mrf.mxu0
        %v420 = vadd.f32 0.0, %v419
        %421 = vmatmul.f32.gmra.mxu0 %v310
        %v422 = vpop.f32.mrf.mxu0
        %v423 = vadd.f32 0.0, %v422
        %424 = vmatmul.f32.gmra.mxu0 %v313
        %v425 = vpop.f32.mrf.mxu0
        %v426 = vadd.f32 0.0, %v425
        %427 = vmatmul.f32.gmra.mxu0 %v316
        %v428 = vpop.f32.mrf.mxu0
        %v429 = vadd.f32 0.0, %v428
        %430 = vmatmul.f32.gmra.mxu0 %v319
        %v431 = vpop.f32.mrf.mxu0
        %v432 = vadd.f32 0.0, %v431
        %433 = vmatmul.f32.gmra.mxu0 %v322
        %v434 = vpop.f32.mrf.mxu0
        %v435 = vadd.f32 0.0, %v434
        %436 = vmatmul.f32.gmra.mxu0 %v325
        %v437 = vpop.f32.mrf.mxu0
        %v438 = vadd.f32 0.0, %v437
        %439 = vmatmul.f32.gmra.mxu0 %v328
        %v440 = vpop.f32.mrf.mxu0
        %v441 = vadd.f32 0.0, %v440
        %442 = vmatmul.f32.gmra.mxu0 %v331
        %v443 = vpop.f32.mrf.mxu0
        %v444 = vadd.f32 0.0, %v443
        %445 = vmatmul.f32.gmra.mxu0 %v334
        %v446 = vpop.f32.mrf.mxu0
        %v447 = vadd.f32 0.0, %v446
        %448 = vmatmul.f32.gmra.mxu0 %v337
        %v449 = vpop.f32.mrf.mxu0
        %v450 = vadd.f32 0.0, %v449
        %451 = vmatmul.f32.gmra.mxu0 %v340
        %v452 = vpop.f32.mrf.mxu0
        %v453 = vadd.f32 0.0, %v452
        %454 = vmatmul.f32.gmra.mxu0 %v343
        %v455 = vpop.f32.mrf.mxu0
        %v456 = vadd.f32 0.0, %v455
        %457 = vmatmul.f32.gmra.mxu0 %v346
        %v458 = vpop.f32.mrf.mxu0
        %v459 = vadd.f32 0.0, %v458
        %460 = vmatmul.f32.gmra.mxu0 %v349
        %v461 = vpop.f32.mrf.mxu0
        %v462 = vadd.f32 0.0, %v461
        %463 = vdwg.mxu0
        %vm464 = vcmask 64512
        %465 = vst.msk [vmem:[%s211] sm:$0xff] %vm464, %v417
        %466 = vst.msk [vmem:[%s211 + $0x8] sm:$0xff] %vm464, %v420
        %467 = vst.msk [vmem:[%s211 + $0x10] sm:$0xff] %vm464, %v423
        %468 = vst.msk [vmem:[%s211 + $0x18] sm:$0xff] %vm464, %v426
        %469 = vst.msk [vmem:[%s211 + $0x20] sm:$0xff] %vm464, %v429
        %470 = vst.msk [vmem:[%s211 + $0x28] sm:$0xff] %vm464, %v432
        %471 = vst.msk [vmem:[%s211 + $0x30] sm:$0xff] %vm464, %v435
        %472 = vst.msk [vmem:[%s211 + $0x38] sm:$0xff] %vm464, %v438
        %473 = vst.msk [vmem:[%s211 + $0x40] sm:$0xff] %vm464, %v441
        %474 = vst.msk [vmem:[%s211 + $0x48] sm:$0xff] %vm464, %v444
        %475 = vst.msk [vmem:[%s211 + $0x50] sm:$0xff] %vm464, %v447
        %476 = vst.msk [vmem:[%s211 + $0x58] sm:$0xff] %vm464, %v450
        %477 = vst.msk [vmem:[%s211 + $0x60] sm:$0xff] %vm464, %v453
        %478 = vst.msk [vmem:[%s211 + $0x68] sm:$0xff] %vm464, %v456
        %479 = vst.msk [vmem:[%s211 + $0x70] sm:$0xff] %vm464, %v459
        %480 = vst.msk [vmem:[%s211 + $0x78] sm:$0xff] %vm464, %v462
        %s481 = sand.u32 %s95, 1
        %s482 = scalar_lea.sflag [#allocation3], %s481
        %s483 = sand.u32 %s95, 1
        %s484 = smul.addr %s483, 64
        %s485 = scalar_lea.vmem [#allocation2], %s484
        %s486 = smul.u32 16, %s19
        %p487 = scmp.lt.s32.totalorder %s486, 31
        %s488 = scalar_select %p487, %s486, 31
        %s489 = smul.addr %s488, 8
        %s490 = scalar_lea.vmem %s4, %s489
        // Predicated region
        $region33: #{tpu_custom_call.1} parent=31 // pred_check
          %p491 = pneg %p105
        $region34: #{tpu_custom_call.1} parent=31 // pred_check_branch
          %493 = sbr.rel (%p491) target = $region36
        $region35: #{tpu_custom_call.1} parent=31 // pred_region
          %s494 = smul.u32 16, %s19
          %496 = vsyncadd %s482, 0
          %s497 = smul.addr %s494, 4
          %s498 = scalar_lea.hbm %s3, %s497
          %s499 = sshll.u32 %s485, 4
          %s500 = int_to_ptr.vmem [resolvable:$true] %s499
          %s501 = sshll.u32 %s498, 4
          %s502 = int_to_ptr.hbm [resolvable:$true] %s501
          %507 = dma.vmem_to_hbm [thread:$0]  %s500, 1024, %s502, %s482, 64, 64, 4
        $region36: #{tpu_custom_call.1} parent=31 // pred_fallthru
          _
        // Predicated region
        $region37: #{tpu_custom_call.1} parent=31 // pred_check
          %p508 = pneg %p131
        $region38: #{tpu_custom_call.1} parent=31 // pred_check_branch
          %510 = sbr.rel (%p508) target = $region40
        $region39: #{tpu_custom_call.1} parent=31 // pred_region
          %s511 = smul.u32 16, %s19
        $region40: #{tpu_custom_call.1} parent=31 // pred_fallthru
          _
      $region32: #{tpu_custom_call.1} parent=5 // pred_fallthru
        _
      %p512 = scmp.le.s32.totalorder 2, %s14
      // Predicated region
      $region41: #{tpu_custom_call.1} parent=5 // pred_check
        %p513 = pneg %p512
      $region42: #{tpu_custom_call.1} parent=5 // pred_check_branch
        %515 = sbr.rel (%p513) target = $region44
      $region43: #{tpu_custom_call.1} parent=5 // pred_region
        %s516 = ssub.s32 %s14, 2
        // Predicated region
        $region45: #{tpu_custom_call.1} parent=43 // pred_check
          %p517 = pneg %p111
        $region46: #{tpu_custom_call.1} parent=43 // pred_check_branch
          %519 = sbr.rel (%p517) target = $region48
        $region47: #{tpu_custom_call.1} parent=43 // pred_region
          %s520 = sand.u32 %s96, 1
          %s521 = scalar_lea.sflag [#allocation3], %s520
          %s522 = sand.u32 %s96, 1
          %s523 = smul.addr %s522, 64
          %s524 = scalar_lea.vmem [#allocation2], %s523
          %526 = dma.done %s521, 1024
        $region48: #{tpu_custom_call.1} parent=43 // pred_fallthru
          _
        // Predicated region
        $region49: #{tpu_custom_call.1} parent=43 // pred_check
          %p527 = pneg %p137
        $region50: #{tpu_custom_call.1} parent=43 // pred_check_branch
          %529 = sbr.rel (%p527) target = $region52
        $region51: #{tpu_custom_call.1} parent=43 // pred_region
          %s530 = smul.u32 16, %s20
          %p531 = scmp.lt.s32.totalorder %s530, 31
          %s532 = scalar_select %p531, %s530, 31
          %s533 = smul.addr %s532, 8
          %s534 = scalar_lea.vmem %s4, %s533
        $region52: #{tpu_custom_call.1} parent=43 // pred_fallthru
          _
      $region44: #{tpu_custom_call.1} parent=5 // pred_fallthru
        _
    $region6: #{tpu_custom_call.1} parent=1 // loop_footer
      %s18 = sadd.s32 1, %s14
    $region7: #{tpu_custom_call.1} parent=1 // loop_footer_branch
      %13 = sbr.rel target = $region3
    $region8: #{tpu_custom_call.1} parent=1 // loop_exit
      _
    %535 = vsyncpa [#allocation3], 1
    %s536 = scalar_lea.sflag [#allocation3], 1
    %537 = vsyncpa %s536, 1

</llo_original>
